<compile_context>
chip_gen: v6e
topology: v6e:2x2x1
jax: 0.10.0
libtpu: 0.0.40
codegen_flags: <defaults>
</compile_context>

<pallas_src>
import functools

import jax
import jax.numpy as jnp
from jax import lax
from jax.experimental import pallas as pl
from jax.experimental.pallas import tpu as pltpu

REP_DIM = 32
LEAKY_SLOPE = 0.1


def _weight_gen_kernel(rep_ref, lw_ref, w_ref):
    """Dynamic filter generation: LeakyReLU(rep @ Lw, 0.1).

    rep_ref : VMEM (B, 32)        f32
    lw_ref  : VMEM (32, OC*k*k)   f32   (transposed nn.Linear weight)
    w_ref   : VMEM (B, OC*k*k)    f32
    """
    z = jnp.dot(rep_ref[...], lw_ref[...], preferred_element_type=jnp.float32)
    w_ref[...] = jnp.where(z > 0, z, LEAKY_SLOPE * z)


def _dyn_conv_kernel(wdyn_ref, xp_ref, out_ref, *, out_channels, oc_per_group,
                     ksize, height, width):
    """One (sample, group) tile of the dynamic grouped convolution.

    wdyn_ref : SMEM (B*OC*k*k,)             f32  -- dynamic filter taps
    xp_ref   : VMEM (1, FPG, Hp, Wp)        f32  -- this group's padded channels
    out_ref  : VMEM (1, OC_per_group, H, W) f32
    """
    b = pl.program_id(0)
    g = pl.program_id(1)
    kk = ksize * ksize

    # The repeat_interleave'd filter is identical across the group's input
    # channels, so pre-sum them once (pure VPU adds).
    s = jnp.sum(xp_ref[0], axis=0)                       # (Hp, Wp)

    accs = [jnp.zeros((height, width), jnp.float32) for _ in range(oc_per_group)]
    for tap in range(kk):                                # static k*k loop
        dy, dx = tap // ksize, tap % ksize
        s_shift = s[dy:dy + height, dx:dx + width]       # static (H, W) window
        for oc_l in range(oc_per_group):                 # static, small
            oc = g * oc_per_group + oc_l
            w = wdyn_ref[(b * out_channels + oc) * kk + tap]   # SMEM scalar read
            accs[oc_l] = accs[oc_l] + w * s_shift
    for oc_l in range(oc_per_group):
        out_ref[0, oc_l, :, :] = accs[oc_l]


def dynamic_conv_layer2_forward(x, representation, linear_weight, *,
                                kernel_size, groups):
    """x: (B, C, H, W) f32; representation: (B, 32) f32;
    linear_weight: (OC*k*k, 32) f32 (PyTorch nn.Linear weight layout)."""
    B, C, H, W = x.shape
    kk = kernel_size * kernel_size
    OC = linear_weight.shape[0] // kk
    fpg = C // groups
    oc_per_group = OC // groups
    pad = kernel_size // 2
    Hp, Wp = H + 2 * pad, W + 2 * pad

    # TODO(synk): ReflectionPad2d is a pure index remap; done with jnp.pad in the
    # wrapper (XLA) rather than re-implemented as an in-kernel gather.
    xp = jnp.pad(x, ((0, 0), (0, 0), (pad, pad), (pad, pad)), mode="reflect")

    # ---- kernel 1: dynamic filter generation (one MXU matmul + LeakyReLU) ----
    wdyn = pl.pallas_call(
        _weight_gen_kernel,
        out_shape=jax.ShapeDtypeStruct((B, OC * kk), jnp.float32),
        in_specs=[pl.BlockSpec(memory_space=pltpu.MemorySpace.VMEM),
                  pl.BlockSpec(memory_space=pltpu.MemorySpace.VMEM)],
        out_specs=pl.BlockSpec(memory_space=pltpu.MemorySpace.VMEM),
    )(representation, jnp.transpose(linear_weight))

    # ---- kernel 2: grouped dynamic conv, grid over (batch, group) ------------
    conv_kernel = functools.partial(
        _dyn_conv_kernel, out_channels=OC, oc_per_group=oc_per_group,
        ksize=kernel_size, height=H, width=W)
    out = pl.pallas_call(
        conv_kernel,
        out_shape=jax.ShapeDtypeStruct((B, OC, H, W), jnp.float32),
        grid=(B, groups),
        in_specs=[
            pl.BlockSpec(memory_space=pltpu.MemorySpace.SMEM),            # taps
            pl.BlockSpec((1, fpg, Hp, Wp), lambda b, g: (b, g, 0, 0)),    # x_pad
        ],
        out_specs=pl.BlockSpec((1, oc_per_group, H, W),
                               lambda b, g: (b, g, 0, 0)),
        compiler_params=pltpu.CompilerParams(
            dimension_semantics=("parallel", "parallel")),
    )(wdyn.reshape(B * OC * kk), xp)
    return out


def _reference_forward(x, representation, linear_weight, *, kernel_size, groups):
    """Pure-JAX reference following the PyTorch code structure."""
    B, C, H, W = x.shape
    kk = kernel_size * kernel_size
    OC = linear_weight.shape[0] // kk
    fpg = C // groups
    pad = kernel_size // 2
    xp = jnp.pad(x, ((0, 0), (0, 0), (pad, pad), (pad, pad)), mode="reflect")
    Hp, Wp = H + 2 * pad, W + 2 * pad

    z = jnp.dot(representation, linear_weight.T, precision=lax.Precision.HIGHEST)
    z = jnp.where(z > 0, z, LEAKY_SLOPE * z)
    kernel = z.reshape(B, OC, 1, kernel_size, kernel_size)
    kernel = jnp.repeat(kernel, fpg, axis=2)                 # repeat_interleave
    out = lax.conv_general_dilated(
        xp.reshape(1, B * C, Hp, Wp),
        kernel.reshape(B * OC, fpg, kernel_size, kernel_size),
        window_strides=(1, 1), padding="VALID",
        dimension_numbers=("NCHW", "OIHW", "NCHW"),
        feature_group_count=B * groups,
        precision=lax.Precision.HIGHEST)
    return out.reshape(B, OC, H, W)


if __name__ == "__main__":
    key = jax.random.PRNGKey(0)
    kx, kr, kw = jax.random.split(key, 3)

    B, C_in, C_out, K, G = 2, 4, 4, 3, 2
    H = W = 16

    x = jax.random.normal(kx, (B, C_in, H, W), dtype=jnp.float32)
    representation = jax.random.normal(kr, (B, REP_DIM), dtype=jnp.float32)
    # nn.Linear(32, C_out*K*K, bias=False).weight -> (C_out*K*K, 32)
    linear_weight = 0.1 * jax.random.normal(kw, (C_out * K * K, REP_DIM),
                                            dtype=jnp.float32)

    out = dynamic_conv_layer2_forward(x, representation, linear_weight,
                                      kernel_size=K, groups=G)
    out = jax.block_until_ready(out)

    ref = _reference_forward(x, representation, linear_weight,
                             kernel_size=K, groups=G)
    assert out.shape == (B, C_out, H, W), out.shape
    assert out.dtype == jnp.float32
    max_err = float(jnp.max(jnp.abs(out - ref)))
    assert max_err < 5e-2, f"max |pallas - reference| = {max_err}"

    print("KERNEL_OK")
</pallas_src>

<mosaic_0001>
module attributes {stable_mosaic.version = 11 : i64} {
  func.func @_weight_gen_kernel(%arg0: memref<2x32xf32, #tpu.memory_space<vmem>>, %arg1: memref<32x36xf32, #tpu.memory_space<vmem>>, %arg2: memref<2x36xf32, #tpu.memory_space<vmem>>) attributes {dimension_semantics = [], scalar_prefetch = 0 : i64, scratch_operands = 0 : i64, tpu.core_type = #tpu.core_type<tc>} {
    %c0 = arith.constant 0 : index
    %c0_0 = arith.constant 0 : index
    %0 = vector.load %arg0[%c0, %c0_0] : memref<2x32xf32, #tpu.memory_space<vmem>>, vector<2x32xf32>
    %c0_1 = arith.constant 0 : index
    %c0_2 = arith.constant 0 : index
    %1 = vector.load %arg1[%c0_1, %c0_2] : memref<32x36xf32, #tpu.memory_space<vmem>>, vector<32x36xf32>
    %cst = arith.constant dense<0.000000e+00> : vector<2x36xf32>
    %2 = tpu.matmul %0, %1, %cst {dimension_numbers = #tpu.dot_dimension_numbers<[1], [0], [0], [1], [0, 0, 1, 1], [], []>} : vector<2x32xf32>, vector<32x36xf32>, vector<2x36xf32> -> vector<2x36xf32>
    %cst_3 = arith.constant 0.000000e+00 : f32
    %3 = vector.broadcast %cst_3 : f32 to vector<2x36xf32>
    %4 = arith.cmpf ogt, %2, %3 : vector<2x36xf32>
    %cst_4 = arith.constant 1.000000e-01 : f32
    %5 = vector.broadcast %cst_4 : f32 to vector<2x36xf32>
    %6 = arith.mulf %5, %2 : vector<2x36xf32>
    %7 = arith.select %4, %2, %6 : vector<2x36xi1>, vector<2x36xf32>
    %c0_5 = arith.constant 0 : index
    %c0_6 = arith.constant 0 : index
    %8 = vector.load %arg2[%c0_5, %c0_6] : memref<2x36xf32, #tpu.memory_space<vmem>>, vector<2x36xf32>
    tpu.vector_store %arg2[%c0_5, %c0_6], %7 {strides = array<i32>} : memref<2x36xf32, #tpu.memory_space<vmem>>, vector<2x36xf32>,
    return
  }
}

</mosaic_0001>

<llo_original>
// kernel: tpu_custom_call.1
$region0: #{tpu_custom_call.1}
  #allocation0 [shape = 'u32[]', space=smem, size = 0x4, offset = 0x4, fixed_abs, tag = 'smem constant byte address 0x4 - core index']
  #allocation1 [shape = 'u32[144,128]{1,0:T(1,128)}', space=vmem, size = 0x12000, scoped, tag = 'internal scratch']
  %s0 = inlined_call_operand.hbm [shape: f32[2,32], index: 0, kind: input, shape index: {}]
  %s1 = inlined_call_operand.hbm [shape: f32[32,36], index: 1, kind: input, shape index: {}]
  %s2 = inlined_call_operand.hbm [shape: f32[2,36], index: 2, kind: output, shape index: {}]
  %s3 = sld [smem:[#allocation0]]
  $region26: #{tpu_custom_call.1} parent=0
    _
  %s5 = ssub.s32 1, %s3
  %s6 = scalar_select 0, %s5, %s3
  $region1: #{tpu_custom_call.1} parent=0
    #allocation2 [shape = 'u8[1024]{0}', space=vmem, size = 0x400, scoped, tag = 'input window, operand 0, single buffered']
    #allocation3 [shape = 's32[1]{0}', space=sflag, size = 0x4, scoped, tag = 'scoped memory for tpu_custom_call.1']
    #allocation4 [shape = 's32[1]{0}', space=sflag, size = 0x4, scoped, tag = 'scoped memory for tpu_custom_call.1']
    #allocation5 [shape = 'u8[16384]{0}', space=vmem, size = 0x4000, scoped, tag = 'input window, operand 1, single buffered']
    #allocation6 [shape = 's32[1]{0}', space=sflag, size = 0x4, scoped, tag = 'scoped memory for tpu_custom_call.1']
    #allocation7 [shape = 'u8[1024]{0}', space=vmem, size = 0x400, scoped, tag = 'output window, operand 0, single buffered']
    %7 = vsyncpa [#allocation3], 0
    %8 = vsyncpa [#allocation6], 0
    %9 = vsyncpa [#allocation4], 0
    // Predicated region
    $region2: #{tpu_custom_call.1} parent=1 // pred_check
      _
    $region3: #{tpu_custom_call.1} parent=1 // pred_check_branch
      %11 = sbr.rel (0) target = $region5
    $region4: #{tpu_custom_call.1} parent=1 // pred_region
      %s13 = ssub.s32 32, 32
      %14 = vsyncadd [#allocation3], %s13
      %s16 = sshll.u32 [#allocation2], 4
      %s17 = int_to_ptr.vmem [resolvable:$true] %s16
      %19 = dma.hbm_to_vmem [thread:$0]  %s0, 32, %s17, [#allocation3]
    $region5: #{tpu_custom_call.1} parent=1 // pred_fallthru
      _
    // Predicated region
    $region6: #{tpu_custom_call.1} parent=1 // pred_check
      _
    $region7: #{tpu_custom_call.1} parent=1 // pred_check_branch
      %21 = sbr.rel (0) target = $region9
    $region8: #{tpu_custom_call.1} parent=1 // pred_region
      %s23 = ssub.s32 512, 512
      %24 = vsyncadd [#allocation6], %s23
      %s25 = sshll.u32 [#allocation5], 4
      %s26 = int_to_ptr.vmem [resolvable:$true] %s25
      %31 = dma.hbm_to_vmem [thread:$0]  %s1, 512, %s26, [#allocation6], 128, 128, 8
    $region9: #{tpu_custom_call.1} parent=1 // pred_fallthru
      _
    // Predicated region
    $region10: #{tpu_custom_call.1} parent=1 // pred_check
      _
    $region11: #{tpu_custom_call.1} parent=1 // pred_check_branch
      %33 = sbr.rel (0) target = $region13
    $region12: #{tpu_custom_call.1} parent=1 // pred_region
      %34 = dma.done [#allocation3], 32
    $region13: #{tpu_custom_call.1} parent=1 // pred_fallthru
      _
    // Predicated region
    $region14: #{tpu_custom_call.1} parent=1 // pred_check
      _
    $region15: #{tpu_custom_call.1} parent=1 // pred_check_branch
      %36 = sbr.rel (0) target = $region17
    $region16: #{tpu_custom_call.1} parent=1 // pred_region
      %37 = dma.done [#allocation6], 512
    $region17: #{tpu_custom_call.1} parent=1 // pred_fallthru
      _
    %v38 = vld [vmem:[#allocation2] sm:$0x3]
    %v39 = vld [vmem:[#allocation5] sm:$0xff]
    %v40 = vld [vmem:[#allocation5 + $0x8] sm:$0xff]
    %v41 = vld [vmem:[#allocation5 + $0x10] sm:$0xff]
    %v42 = vld [vmem:[#allocation5 + $0x18] sm:$0xff]
    %vm43 = vcmask 261120
    %v45 = vsel %vm43, %v38, 0
    %47 = vmatprep.subr.mxu0 0.0
    %48 = vmatpush1.msra.mxu0 0.0
    %49 = vmatprep.subr.mxu0 0.0
    %50 = vmatpush1.msra.mxu0 0.0
    %51 = vmatprep.subr.mxu0 0.0
    %52 = vmatpush1.msra.mxu0 0.0
    %53 = vmatprep.subr.mxu0 0.0
    %54 = vmatpush1.msra.mxu0 0.0
    %55 = vmatprep.subr.mxu0 0.0
    %56 = vmatpush1.msra.mxu0 0.0
    %57 = vmatprep.subr.mxu0 0.0
    %58 = vmatpush1.msra.mxu0 0.0
    %59 = vmatprep.subr.mxu0 0.0
    %60 = vmatpush1.msra.mxu0 0.0
    %61 = vmatprep.subr.mxu0 0.0
    %62 = vmatpush1.msra.mxu0 0.0
    %63 = vmatprep.subr.mxu0 0.0
    %64 = vmatpush1.msra.mxu0 0.0
    %65 = vmatprep.subr.mxu0 0.0
    %66 = vmatpush1.msra.mxu0 0.0
    %67 = vmatprep.subr.mxu0 0.0
    %68 = vmatpush1.msra.mxu0 0.0
    %69 = vmatprep.subr.mxu0 0.0
    %70 = vmatpush1.msra.mxu0 0.0
    %71 = vmatprep.subr.mxu0 0.0
    %72 = vmatpush1.msra.mxu0 %v42
    %73 = vmatprep.subr.mxu0 0.0
    %74 = vmatpush1.msra.mxu0 %v41
    %75 = vmatprep.subr.mxu0 0.0
    %76 = vmatpush1.msra.mxu0 %v40
    %77 = vmatprep.subr.mxu0 0.0
    %78 = vmatpush1.msra.mxu0 %v39
    %79 = vmatprep.subr.mxu0 0.0
    %80 = vmatpush2.msra.mxu0 0.0
    %81 = vmatprep.subr.mxu0 0.0
    %82 = vmatpush2.msra.mxu0 0.0
    %83 = vmatprep.subr.mxu0 0.0
    %84 = vmatpush2.msra.mxu0 0.0
    %85 = vmatprep.subr.mxu0 0.0
    %86 = vmatpush2.msra.mxu0 0.0
    %87 = vmatprep.subr.mxu0 0.0
    %88 = vmatpush2.msra.mxu0 0.0
    %89 = vmatprep.subr.mxu0 0.0
    %90 = vmatpush2.msra.mxu0 0.0
    %91 = vmatprep.subr.mxu0 0.0
    %92 = vmatpush2.msra.mxu0 0.0
    %93 = vmatprep.subr.mxu0 0.0
    %94 = vmatpush2.msra.mxu0 0.0
    %95 = vmatprep.subr.mxu0 0.0
    %96 = vmatpush2.msra.mxu0 0.0
    %97 = vmatprep.subr.mxu0 0.0
    %98 = vmatpush2.msra.mxu0 0.0
    %99 = vmatprep.subr.mxu0 0.0
    %100 = vmatpush2.msra.mxu0 0.0
    %101 = vmatprep.subr.mxu0 0.0
    %102 = vmatpush2.msra.mxu0 0.0
    %103 = vmatprep.subr.mxu0 0.0
    %104 = vmatpush2.msra.mxu0 0.0
    %105 = vmatprep.subr.mxu0 0.0
    %106 = vmatpush2.msra.mxu0 0.0
    %107 = vmatprep.subr.mxu0 0.0
    %108 = vmatpush2.msra.mxu0 0.0
    %109 = vmatprep.subr.mxu0 0.0
    %110 = vmatpush2.msra.mxu0 0.0
    %111 = vmatprep.mubr.f32.mxu0 0.0
    %112 = vmatmul.mubr.f32.gmra.mxu0 %v45
    %v113 = vpop.f32.mrf.mxu0
    %v114 = vadd.f32 0.0, %v113
    %v115 = vpop.f32.mrf.mxu0
    %116 = vdwg.mxu0
    %vm117 = vcmp.gt.f32.partialorder %v114, 0.0
    %v118 = vmul.f32 %v114, 0.1
    %v119 = vsel %vm117, %v114, %v118
    %vm120 = vcmask 287744
    %121 = vst.msk [vmem:[#allocation7] sm:$0x3] %vm120, %v119
    // Predicated region
    $region18: #{tpu_custom_call.1} parent=1 // pred_check
      _
    $region19: #{tpu_custom_call.1} parent=1 // pred_check_branch
      %123 = sbr.rel (0) target = $region21
    $region20: #{tpu_custom_call.1} parent=1 // pred_region
      %s125 = ssub.s32 32, 32
      %126 = vsyncadd [#allocation4], %s125
      %s128 = sshll.u32 [#allocation7], 4
      %s129 = int_to_ptr.vmem [resolvable:$true] %s128
      %131 = dma.vmem_to_hbm [thread:$0]  %s129, 32, %s2, [#allocation4]
    $region21: #{tpu_custom_call.1} parent=1 // pred_fallthru
      _
    // Predicated region
    $region22: #{tpu_custom_call.1} parent=1 // pred_check
      _
    $region23: #{tpu_custom_call.1} parent=1 // pred_check_branch
      %133 = sbr.rel (0) target = $region25
    $region24: #{tpu_custom_call.1} parent=1 // pred_region
      %134 = dma.done [#allocation4], 32
    $region25: #{tpu_custom_call.1} parent=1 // pred_fallthru
      _
    %135 = vsyncpa [#allocation3], 1
    %136 = vsyncpa [#allocation6], 1
    %137 = vsyncpa [#allocation4], 1

</llo_original>
